<compile_context>
chip_gen: v7x
topology: tpu7x:2x2x1
jax: 0.10.0
libtpu: 0.0.40
codegen_flags: <defaults>
</compile_context>

<pallas_src>
import functools

import jax
import jax.numpy as jnp
from jax.experimental import pallas as pl
from jax.experimental.pallas import tpu as pltpu


_MAX_S_TILE = 512                 # sequence rows per grid step for long S
_TARGET_TOKENS_TILE = 4 << 20     # ~4 MiB tokens tile -> ~85%+ of HBM BW
_VMEM_BUDGET = 40 << 20           # double-buffered footprint cap (v7x: 64 MiB/TC)


def _mean_pool_kernel(tokens_ref, mask_ref, out_ref, acc_ref, den_ref,
                      *, seq_len, s_tile):
    """One (batch-tile, hidden-tile, seq-tile) step of masked mean pooling."""
    s = pl.program_id(2)

    @pl.when(s == 0)
    def _init():
        acc_ref[...] = jnp.zeros_like(acc_ref)
        den_ref[...] = jnp.zeros_like(den_ref)

    # HBM traffic stays at the native token width; arithmetic is f32 in-vreg.
    t = tokens_ref[...].astype(jnp.float32)      # (TB, S_TILE, H_TILE)
    m = mask_ref[...].astype(jnp.float32)        # (TB, S_TILE)

    if seq_len % s_tile != 0:
        # Ragged last S tile: out-of-bounds rows hold garbage (possibly NaN),
        # so select them to zero instead of relying on a zero-mask multiply.
        pos = s * s_tile + jax.lax.broadcasted_iota(jnp.int32, m.shape, 1)
        keep = pos < seq_len
        m = jnp.where(keep, m, 0.0)
        t = jnp.where(keep[:, :, None], t, 0.0)

    # Masked sum over the sequence (sublane) axis: VPU mul + XLU reduce; both
    # have >2x slack under the HBM roofline, so the kernel stays DMA-bound.
    acc_ref[...] += jnp.sum(t * m[:, :, None], axis=1)
    den_ref[...] += jnp.sum(m, axis=1, keepdims=True)

    @pl.when(s == pl.num_programs(2) - 1)
    def _finalize():
        denom = jnp.maximum(den_ref[...], 1e-9)      # torch.clamp(min=1e-9)
        out_ref[...] = (acc_ref[...] / denom).astype(out_ref.dtype)


def _select_tiles(B, S, H, tok_item, mask_item, block_b, block_s):
    """Pick (tb, s_tile, h_tile) respecting the (8,128) block constraints."""
    # --- sequence tile ---
    if block_s is not None:
        s_tile = min(block_s, S)
    else:
        s_tile = S if S <= _MAX_S_TILE else _MAX_S_TILE
    if s_tile != S:
        # Partial S tiling: mask's last dim & tokens' sublane dim -> x128.
        s_tile = max(128, (s_tile // 128) * 128)

    # --- batch tile: target ~4 MiB tokens tile, sublane-multiple rows ---
    if block_b is not None:
        tb = min(block_b, B)
        if B > 8:
            tb = max(8, (tb // 8) * 8)
    elif B <= 8:
        tb = B
    else:
        row_bytes = max(1, s_tile * H * tok_item)
        tb = min(B, max(8, _TARGET_TOKENS_TILE // row_bytes))
        tb = max(8, (tb // 8) * 8)
        # v7x megacore: prefer >=2 grid steps along the "parallel" batch axis.
        while tb > 8 and pl.cdiv(B, tb) < 2:
            tb = max(8, ((tb // 2) // 8) * 8)

    # --- hidden tile: split H only when the batch axis has a single step ---
    if pl.cdiv(B, tb) >= 2 or H < 256:
        h_tile = H
    else:
        h_tile = max(128, ((H // 2) // 128) * 128)

    def footprint(tb_, s_tile_, h_tile_):
        tok = tb_ * s_tile_ * h_tile_ * tok_item
        msk = tb_ * s_tile_ * mask_item
        out = tb_ * h_tile_ * 4
        # f32 upcast temporary + accumulators + headroom (single-buffered).
        extra = tb_ * s_tile_ * h_tile_ * 4 + 2 * tb_ * h_tile_ * 4 + (1 << 20)
        return 2 * (tok + msk + out) + extra

    # Shrink tb then s_tile until the double-buffered pipeline fits the budget.
    min_tb = B if B <= 8 else 8
    while footprint(tb, s_tile, h_tile) > _VMEM_BUDGET:
        if tb > min_tb:
            tb = max(min_tb, ((tb // 2) // 8) * 8) if B > 8 else min_tb
        elif s_tile >= 256:
            s_tile = max(128, ((s_tile // 2) // 128) * 128)
        else:
            break  # pathological S*H; the vmem limit below still covers it

    return tb, s_tile, h_tile, footprint(tb, s_tile, h_tile)


def mean_pooling(tokens, attention_mask, *, block_b=None, block_s=None):
    """Masked mean pooling over the sequence axis (PyTorch-equivalent forward).

    Args:
      tokens:         [B, S, H] float array (model last_hidden_state; bf16 or
                      f32 -- streamed in its native dtype, no f32 copy made).
      attention_mask: [B, S] int/float array; nonzero = valid token.
      block_b/block_s: optional tile-size overrides (batch rows / seq rows).

    Returns:
      [B, H] float32 pooled embeddings.
    """
    B, S, H = tokens.shape
    assert attention_mask.shape == (B, S)

    tb, s_tile, h_tile, vmem_needed = _select_tiles(
        B, S, H, tokens.dtype.itemsize, attention_mask.dtype.itemsize,
        block_b, block_s)
    num_b = pl.cdiv(B, tb)
    num_h = pl.cdiv(H, h_tile)
    num_s = pl.cdiv(S, s_tile)

    # Always pass a scoped-VMEM limit: v5e's default is only 16 MiB (v6e/v7x:
    # 32 MiB); our budgeted footprint (<= ~40 MiB) fits every generation.
    vmem_limit = int(max(vmem_needed, 32 << 20))

    kernel = functools.partial(_mean_pool_kernel, seq_len=S, s_tile=s_tile)

    cost = pl.CostEstimate(
        flops=2 * B * S * H,
        transcendentals=0,
        bytes_accessed=(B * S * H * tokens.dtype.itemsize
                        + B * S * attention_mask.dtype.itemsize
                        + B * H * 4),
    )

    return pl.pallas_call(
        kernel,
        out_shape=jax.ShapeDtypeStruct((B, H), jnp.float32),
        grid_spec=pltpu.PrefetchScalarGridSpec(
            num_scalar_prefetch=0,
            grid=(num_b, num_h, num_s),
            in_specs=[
                pl.BlockSpec((tb, s_tile, h_tile), lambda b, h, s: (b, s, h)),
                pl.BlockSpec((tb, s_tile), lambda b, h, s: (b, s)),
            ],
            out_specs=pl.BlockSpec((tb, h_tile), lambda b, h, s: (b, h)),
            scratch_shapes=[
                pltpu.VMEM((tb, h_tile), jnp.float32),   # weighted-sum acc
                pltpu.VMEM((tb, 1), jnp.float32),        # mask-count acc
            ],
        ),
        compiler_params=pltpu.CompilerParams(
            dimension_semantics=("parallel", "parallel", "arbitrary"),
            vmem_limit_bytes=vmem_limit,
        ),
        cost_estimate=cost,
    )(tokens, attention_mask)


def _reference(tokens, attention_mask):
    # Plain-JAX reference: same math as the PyTorch forward, in f32.
    tok_f = tokens.astype(jnp.float32)
    mask_f = attention_mask.astype(jnp.float32)[..., None]
    return jnp.sum(tok_f * mask_f, axis=1) / jnp.maximum(
        jnp.sum(mask_f, axis=1), 1e-9)


if __name__ == "__main__":
    key = jax.random.PRNGKey(0)
    k1, k2, k3 = jax.random.split(key, 3)

    # 1) Tiny bf16 case (single grid step), standing in for the AutoModel
    #    last_hidden_state in the native TPU serving dtype.
    B, S, H = 2, 8, 32
    tokens = jax.random.normal(k1, (B, S, H), jnp.float32).astype(jnp.bfloat16)
    lengths = jnp.array([5, 8], dtype=jnp.int32)
    mask = (jnp.arange(S)[None, :] < lengths[:, None]).astype(jnp.int32)

    out = jax.block_until_ready(mean_pooling(tokens, mask))
    ref = _reference(tokens, mask)
    assert out.shape == (B, H)
    assert out.dtype == jnp.float32
    assert jnp.allclose(out, ref, atol=1e-2, rtol=1e-2)

    # 2) Ragged batch: B=13 -> two batch blocks, last one partial; handled by
    #    Pallas partial blocks (no jnp.pad copy of tokens is made).
    B2 = 13
    tokens2 = jax.random.normal(k2, (B2, S, H), jnp.float32).astype(jnp.bfloat16)
    lengths2 = (jnp.arange(B2, dtype=jnp.int32) % S) + 1
    mask2 = (jnp.arange(S)[None, :] < lengths2[:, None]).astype(jnp.int32)

    out2 = jax.block_until_ready(mean_pooling(tokens2, mask2))
    ref2 = _reference(tokens2, mask2)
    assert out2.shape == (B2, H)
    assert jnp.allclose(out2, ref2, atol=1e-2, rtol=1e-2)

    # 3) f32 case exercising the S reduction grid axis (two S tiles, ragged
    #    last one) and the H split used when the batch axis has one grid step.
    B3, S3, H3 = 4, 160, 512
    tokens3 = jax.random.normal(k3, (B3, S3, H3), jnp.float32)
    lengths3 = jnp.array([1, 37, 128, 160], dtype=jnp.int32)
    mask3 = (jnp.arange(S3)[None, :] < lengths3[:, None]).astype(jnp.int32)

    out3 = jax.block_until_ready(mean_pooling(tokens3, mask3, block_s=128))
    ref3 = _reference(tokens3, mask3)
    assert out3.shape == (B3, H3)
    assert jnp.allclose(out3, ref3, atol=1e-4, rtol=1e-4)

    print("KERNEL_OK")
</pallas_src>

<mosaic_0001>
module attributes {stable_mosaic.version = 11 : i64} {
  func.func @_mean_pool_kernel(%arg0: i32, %arg1: i32, %arg2: i32, %arg3: memref<2x8x32xbf16, #tpu.memory_space<vmem>>, %arg4: memref<2x8xi32, #tpu.memory_space<vmem>>, %arg5: memref<2x32xf32, #tpu.memory_space<vmem>>, %arg6: memref<2x32xf32, #tpu.memory_space<vmem>>, %arg7: memref<2x1xf32, #tpu.memory_space<vmem>>) attributes {dimension_semantics = [#tpu.dimension_semantics<parallel>, #tpu.dimension_semantics<parallel>, #tpu.dimension_semantics<arbitrary>], iteration_bounds = array<i64: 1, 1, 1>, scalar_prefetch = 0 : i64, scratch_operands = 2 : i64, tpu.core_type = #tpu.core_type<tc>, window_params = [{transform_indices = @transform_0, window_bounds = array<i64: 2, 8, 32>}, {transform_indices = @transform_1, window_bounds = array<i64: 2, 8>}, {transform_indices = @transform_2, window_bounds = array<i64: 2, 32>}]} {
    %c0_i32 = arith.constant 0 : i32
    %0 = arith.cmpi eq, %arg2, %c0_i32 : i32
    %1 = arith.extui %0 : i1 to i32
    %c0_i32_0 = arith.constant 0 : i32
    %2 = arith.cmpi ne, %1, %c0_i32_0 : i32
    scf.if %2 {
      %cst_16 = arith.constant 0.000000e+00 : f32
      %22 = vector.broadcast %cst_16 : f32 to vector<2x32xf32>
      %c0_17 = arith.constant 0 : index
      %c0_18 = arith.constant 0 : index
      %23 = vector.load %arg6[%c0_17, %c0_18] : memref<2x32xf32, #tpu.memory_space<vmem>>, vector<2x32xf32>
      tpu.vector_store %arg6[%c0_17, %c0_18], %22 {strides = array<i32>} : memref<2x32xf32, #tpu.memory_space<vmem>>, vector<2x32xf32>,
      %cst_19 = arith.constant 0.000000e+00 : f32
      %24 = vector.broadcast %cst_19 : f32 to vector<2x1xf32>
      %c0_20 = arith.constant 0 : index
      %c0_21 = arith.constant 0 : index
      %25 = vector.load %arg7[%c0_20, %c0_21] : memref<2x1xf32, #tpu.memory_space<vmem>>, vector<2x1xf32>
      tpu.vector_store %arg7[%c0_20, %c0_21], %24 {strides = array<i32>} : memref<2x1xf32, #tpu.memory_space<vmem>>, vector<2x1xf32>,
    } else {
    }
    %c0 = arith.constant 0 : index
    %c0_1 = arith.constant 0 : index
    %c0_2 = arith.constant 0 : index
    %3 = vector.load %arg3[%c0, %c0_1, %c0_2] : memref<2x8x32xbf16, #tpu.memory_space<vmem>>, vector<2x8x32xbf16>
    %4 = arith.extf %3 : vector<2x8x32xbf16> to vector<2x8x32xf32>
    %c0_3 = arith.constant 0 : index
    %c0_4 = arith.constant 0 : index
    %5 = vector.load %arg4[%c0_3, %c0_4] : memref<2x8xi32, #tpu.memory_space<vmem>>, vector<2x8xi32>
    %6 = arith.sitofp %5 : vector<2x8xi32> to vector<2x8xf32>
    %c0_5 = arith.constant 0 : index
    %c0_6 = arith.constant 0 : index
    %7 = vector.load %arg6[%c0_5, %c0_6] : memref<2x32xf32, #tpu.memory_space<vmem>>, vector<2x32xf32>
    %8 = vector.shape_cast %6 : vector<2x8xf32> to vector<2x8x1xf32>
    %9 = vector.broadcast %8 : vector<2x8x1xf32> to vector<2x8x32xf32>
    %10 = arith.mulf %4, %9 : vector<2x8x32xf32>
    %cst = arith.constant dense<0.000000e+00> : vector<2x32xf32>
    %11 = vector.multi_reduction <add>, %10, %cst [1] : vector<2x8x32xf32> to vector<2x32xf32>
    %12 = arith.addf %7, %11 : vector<2x32xf32>
    %c0_7 = arith.constant 0 : index
    %c0_8 = arith.constant 0 : index
    %13 = vector.load %arg6[%c0_7, %c0_8] : memref<2x32xf32, #tpu.memory_space<vmem>>, vector<2x32xf32>
    tpu.vector_store %arg6[%c0_7, %c0_8], %12 {strides = array<i32>} : memref<2x32xf32, #tpu.memory_space<vmem>>, vector<2x32xf32>,
    %c0_9 = arith.constant 0 : index
    %c0_10 = arith.constant 0 : index
    %14 = vector.load %arg7[%c0_9, %c0_10] : memref<2x1xf32, #tpu.memory_space<vmem>>, vector<2x1xf32>
    %cst_11 = arith.constant dense<0.000000e+00> : vector<2xf32>
    %15 = vector.multi_reduction <add>, %6, %cst_11 [1] : vector<2x8xf32> to vector<2xf32>
    %16 = vector.shape_cast %15 : vector<2xf32> to vector<2x1xf32>
    %17 = arith.addf %14, %16 : vector<2x1xf32>
    %c0_12 = arith.constant 0 : index
    %c0_13 = arith.constant 0 : index
    %18 = vector.load %arg7[%c0_12, %c0_13] : memref<2x1xf32, #tpu.memory_space<vmem>>, vector<2x1xf32>
    tpu.vector_store %arg7[%c0_12, %c0_13], %17 {strides = array<i32>} : memref<2x1xf32, #tpu.memory_space<vmem>>, vector<2x1xf32>,
    %c0_i32_14 = arith.constant 0 : i32
    %19 = arith.cmpi eq, %arg2, %c0_i32_14 : i32
    %20 = arith.extui %19 : i1 to i32
    %c0_i32_15 = arith.constant 0 : i32
    %21 = arith.cmpi ne, %20, %c0_i32_15 : i32
    scf.if %21 {
      %c0_16 = arith.constant 0 : index
      %c0_17 = arith.constant 0 : index
      %22 = vector.load %arg7[%c0_16, %c0_17] : memref<2x1xf32, #tpu.memory_space<vmem>>, vector<2x1xf32>
      %cst_18 = arith.constant 9.99999971E-10 : f32
      %23 = vector.broadcast %cst_18 : f32 to vector<2x1xf32>
      %24 = arith.maximumf %22, %23 : vector<2x1xf32>
      %c0_19 = arith.constant 0 : index
      %c0_20 = arith.constant 0 : index
      %25 = vector.load %arg6[%c0_19, %c0_20] : memref<2x32xf32, #tpu.memory_space<vmem>>, vector<2x32xf32>
      %26 = vector.broadcast %24 : vector<2x1xf32> to vector<2x32xf32>
      %27 = arith.divf %25, %26 : vector<2x32xf32>
      %c0_21 = arith.constant 0 : index
      %c0_22 = arith.constant 0 : index
      %28 = vector.load %arg5[%c0_21, %c0_22] : memref<2x32xf32, #tpu.memory_space<vmem>>, vector<2x32xf32>
      tpu.vector_store %arg5[%c0_21, %c0_22], %27 {strides = array<i32>} : memref<2x32xf32, #tpu.memory_space<vmem>>, vector<2x32xf32>,
    } else {
    }
    return
  }
  func.func @transform_0(%arg0: i32, %arg1: i32, %arg2: i32) -> (i32, i32, i32) {
    %c0_i32 = arith.constant 0 : i32
    return %arg0, %arg2, %arg1 : i32, i32, i32
  }
  func.func @transform_1(%arg0: i32, %arg1: i32, %arg2: i32) -> (i32, i32) {
    %c0_i32 = arith.constant 0 : i32
    return %arg0, %arg2 : i32, i32
  }
  func.func @transform_2(%arg0: i32, %arg1: i32, %arg2: i32) -> (i32, i32) {
    %c0_i32 = arith.constant 0 : i32
    return %arg0, %arg1 : i32, i32
  }
}

</mosaic_0001>

<llo_original>
// kernel: tpu_custom_call.1
$region0: #{tpu_custom_call.1}
  #allocation0 [shape = 'u32[]', space=smem, size = 0x4, offset = 0x4, fixed_abs, tag = 'smem constant byte address 0x4 - core index']
  #allocation1 [shape = 'u32[144,128]{1,0:T(1,128)}', space=vmem, size = 0x12000, scoped, tag = 'internal scratch']
  #allocation2 [shape = 'f32[2,32]{1,0:T(2,128)}', space=vmem, size = 0x400, scoped, tag = 'scratch operand']
  #allocation3 [shape = 'f32[2,1]{1,0:T(2,128)}', space=vmem, size = 0x400, scoped, tag = 'scratch operand']
  %s0 = inlined_call_operand.hbm [shape: bf16[2,8,32], index: 0, kind: input, shape index: {}]
  %s1 = inlined_call_operand.vmem [shape: s32[2,8], index: 1, kind: input, shape index: {}]
  %s2 = inlined_call_operand.hbm [shape: f32[2,32], index: 2, kind: output, shape index: {}]
  %s3 = sld [smem:[#allocation0]]
  $region30: #{tpu_custom_call.1} parent=0
    _
  %s5 = ssub.s32 1, %s3
  %s6 = scalar_select 0, %s5, %s3
  $region1: #{tpu_custom_call.1} parent=0
    #allocation4 [shape = 'u8[4096]{0}', space=vmem, size = 0x1000, scoped, tag = 'input window, operand 0, single buffered']
    #allocation5 [shape = 's32[1]{0}', space=sflag, size = 0x4, scoped, tag = 'scoped memory for tpu_custom_call.1']
    #allocation6 [shape = 's32[1]{0}', space=sflag, size = 0x4, scoped, tag = 'scoped memory for tpu_custom_call.1']
    #allocation7 [shape = 'u8[1024]{0}', space=vmem, size = 0x400, scoped, tag = 'output window, operand 0, single buffered']
    %7 = vsyncpa [#allocation5], 0
    %8 = vsyncpa [#allocation6], 0
    // Predicated region
    $region2: #{tpu_custom_call.1} parent=1 // pred_check
      _
    $region3: #{tpu_custom_call.1} parent=1 // pred_check_branch
      %10 = sbr.rel (0) target = $region5
    $region4: #{tpu_custom_call.1} parent=1 // pred_region
      %s12 = ssub.s32 128, 128
      %13 = vsyncadd [#allocation5], %s12
      %s14 = sshll.u32 [#allocation4], 4
      %s15 = int_to_ptr.vmem [resolvable:$true] %s14
      %20 = dma.hbm_to_vmem [thread:$0]  %s0, 128, %s15, [#allocation5], 64, 64, 4
    $region5: #{tpu_custom_call.1} parent=1 // pred_fallthru
      _
    // Predicated region
    $region6: #{tpu_custom_call.1} parent=1 // pred_check
      _
    $region7: #{tpu_custom_call.1} parent=1 // pred_check_branch
      %22 = sbr.rel (0) target = $region9
    $region8: #{tpu_custom_call.1} parent=1 // pred_region
      _
    $region9: #{tpu_custom_call.1} parent=1 // pred_fallthru
      _
    // Predicated region
    $region10: #{tpu_custom_call.1} parent=1 // pred_check
      _
    $region11: #{tpu_custom_call.1} parent=1 // pred_check_branch
      %24 = sbr.rel (0) target = $region13
    $region12: #{tpu_custom_call.1} parent=1 // pred_region
      %25 = dma.done [#allocation5], 128
    $region13: #{tpu_custom_call.1} parent=1 // pred_fallthru
      _
    %p26 = scmp.eq.s32.totalorder 0, 0
    // Predicated region
    $region14: #{tpu_custom_call.1} parent=1 // pred_check
      %p27 = pneg %p26
    $region15: #{tpu_custom_call.1} parent=1 // pred_check_branch
      %29 = sbr.rel (%p27) target = $region17
    $region16: #{tpu_custom_call.1} parent=1 // pred_region
      %vm30 = vcmask 254976
      %31 = vst.msk [vmem:[#allocation2] sm:$0x3] %vm30, 0.0
      %vm32 = vcmask 1024
      %33 = vst.msk [vmem:[#allocation3] sm:$0x3] %vm32, 0.0
    $region17: #{tpu_custom_call.1} parent=1 // pred_fallthru
      _
    %v34 = vld [vmem:[#allocation4] sm:$0xf]
    %v35 = vld [vmem:[#allocation4 + $0x4] sm:$0xf]
    %v36 = vunpack.c.l.bf16 %v34
    %v37 = vunpack.c.l.bf16 %v35
    %v38 = vld [vmem:[%s1] sm:$0x3]
    %v39 = vcvt.s32.f32 %v38
    %v40 = vld [vmem:[#allocation2] sm:$0x3]
    %v41 = vlaneseq
    %v42 = vshrl.u32 %v41, 7
    %v43 = vsub.s32 0, %v42
    %v44 = vrot.slane %v39, %v43
    %46 = vbcast.lane.b32.xlu0 %v44, 256
    %v47 = vpop.permute.xlu0 %46
    %v48 = vlaneseq
    %v49 = vshrl.u32 %v48, 7
    %v50 = vsub.s32 1, %v49
    %v51 = vrot.slane %v39, %v50
    %53 = vbcast.lane.b32.xlu0 %v51, 256
    %v54 = vpop.permute.xlu0 %53
    %v55 = vmul.f32 %v36, %v47
    %v56 = vmul.f32 %v37, %v54
    %vm57 = vcmask 261120
    %v58 = vsel %vm57, %v55, 0.0
    %v59 = vrot.slane %v58, 4
    %v60 = vadd.f32 %v58, %v59
    %v61 = vrot.slane %v60, 2
    %v62 = vadd.f32 %v60, %v61
    %v63 = vrot.slane %v62, 1
    %v64 = vadd.f32 %v62, %v63
    %v65 = vsel %vm57, %v56, 0.0
    %v66 = vrot.slane %v65, 4
    %v67 = vadd.f32 %v65, %v66
    %v68 = vrot.slane %v67, 2
    %v69 = vadd.f32 %v67, %v68
    %v70 = vrot.slane %v69, 1
    %v71 = vadd.f32 %v69, %v70
    %vm74 = vcmask 1041409
    %v75 = vsel %vm74, %v71, %v64
    %v77 = vadd.f32 %v40, %v75
    %vm78 = vcmask 254976
    %79 = vst.msk [vmem:[#allocation2] sm:$0x3] %vm78, %v77
    %v80 = vld [vmem:[#allocation3] sm:$0x3]
    %vm81 = vcmask 58368
    %v82 = vsel %vm81, %v39, 0.0
    %83 = vadd.xlane.f32.xlu0 %v82
    %v84 = vpop.xlane.xlu0 %83
    %v85 = vadd.f32 %v80, %v84
    %vm86 = vcmask 1024
    %87 = vst.msk [vmem:[#allocation3] sm:$0x3] %vm86, %v85
    // Predicated region
    $region18: #{tpu_custom_call.1} parent=1 // pred_check
      %p88 = pneg %p26
    $region19: #{tpu_custom_call.1} parent=1 // pred_check_branch
      %90 = sbr.rel (%p88) target = $region21
    $region20: #{tpu_custom_call.1} parent=1 // pred_region
      %v91 = vld [vmem:[#allocation3] sm:$0x3]
      %v92 = vmax.f32 %v91, 1e-09
      %v93 = vld [vmem:[#allocation2] sm:$0x3]
      %95 = vset.pattern.permute.xlu0 0
      %96 = vperm.xlu0 %95, %v92
      %v97 = vpop.permute.xlu0 %96
      %v99 = vrcp.pop %v97
      %v100 = vmul.f32 %v93, %v99
      %101 = vst.msk [vmem:[#allocation7] sm:$0x3] %vm78, %v100
    $region21: #{tpu_custom_call.1} parent=1 // pred_fallthru
      _
    // Predicated region
    $region22: #{tpu_custom_call.1} parent=1 // pred_check
      _
    $region23: #{tpu_custom_call.1} parent=1 // pred_check_branch
      %103 = sbr.rel (0) target = $region25
    $region24: #{tpu_custom_call.1} parent=1 // pred_region
      %s105 = ssub.s32 32, 32
      %106 = vsyncadd [#allocation6], %s105
      %s108 = sshll.u32 [#allocation7], 4
      %s109 = int_to_ptr.vmem [resolvable:$true] %s108
      %111 = dma.vmem_to_hbm [thread:$0]  %s109, 32, %s2, [#allocation6]
    $region25: #{tpu_custom_call.1} parent=1 // pred_fallthru
      _
    // Predicated region
    $region26: #{tpu_custom_call.1} parent=1 // pred_check
      _
    $region27: #{tpu_custom_call.1} parent=1 // pred_check_branch
      %113 = sbr.rel (0) target = $region29
    $region28: #{tpu_custom_call.1} parent=1 // pred_region
      %114 = dma.done [#allocation6], 32
    $region29: #{tpu_custom_call.1} parent=1 // pred_fallthru
      _
    %115 = vsyncpa [#allocation5], 1
    %116 = vsyncpa [#allocation6], 1

</llo_original>
